<compile_context>
chip_gen: v7x
topology: tpu7x:2x2x1
jax: 0.10.0
libtpu: 0.0.40
codegen_flags: <defaults>
</compile_context>

<pallas_src>
import jax
import jax.numpy as jnp
from jax.experimental import pallas as pl
from jax.experimental.pallas import tpu as pltpu


def _round_up(x, m):
    return ((x + m - 1) // m) * m


def _vmem_capacity_bytes():
    try:
        cap = int(pltpu.get_tpu_info().vmem_capacity_bytes)
        if cap > 0:
            return cap
    except Exception:
        pass
    try:
        kind = jax.devices()[0].device_kind.lower()
    except Exception:
        kind = ""
    return (64 << 20) if "v7" in kind else (128 << 20)


def _num_tensorcores():
    try:
        kind = jax.devices()[0].device_kind.lower()
    except Exception:
        return 1
    return 2 if ("v7" in kind or "v4" in kind or "v5p" in kind) else 1


def _adapter_kernel(x_ref, wd_ref, bd_ref, wu_ref, bu_ref, o_ref):
    # MXU in the storage dtype, f32 accumulation; all post-MXU math in f32.
    x = x_ref[...]
    z = jnp.dot(x, wd_ref[...], preferred_element_type=jnp.float32)
    z = jnp.maximum(z + bd_ref[...], 0.0)                    # bias + ReLU (f32)
    z = jnp.dot(z.astype(wu_ref.dtype), wu_ref[...],
                preferred_element_type=jnp.float32)
    z = z + bu_ref[...]                                      # bias (f32)
    o_ref[...] = (x.astype(jnp.float32) + z).astype(o_ref.dtype)   # residual


def prepare_adapter_params(w_down, b_down, w_up, b_up):
    """One-time packing of PyTorch nn.Linear params.

    w_down: (down, dim), b_down: (down,), w_up: (dim, down), b_up: (dim,).
    Pads the bottleneck dim to a lane-dense multiple of 128 (numerically exact:
    ReLU(x@0+0)=0 and zero Wu rows contribute 0).
    """
    down, dim = w_down.shape
    down_p = _round_up(down, 128)
    wd_t = jnp.pad(w_down.T, ((0, 0), (0, down_p - down)))        # (dim, down_p)
    wu_t = jnp.pad(w_up.T, ((0, down_p - down), (0, 0)))          # (down_p, dim)
    bd = jnp.pad(b_down.astype(jnp.float32), (0, down_p - down)).reshape(1, down_p)
    bu = b_up.astype(jnp.float32).reshape(1, dim)
    return {"wd_t": wd_t, "bd": bd, "wu_t": wu_t, "bu": bu,
            "dim": dim, "down": down, "down_p": down_p}


def adapter_forward(x, params, *, row_tile=1024):
    batch, seq, dim = x.shape
    assert dim == params["dim"]
    down, down_p = params["down"], params["down_p"]
    tokens = batch * seq

    x_bytes = jnp.dtype(x.dtype).itemsize
    w_bytes = jnp.dtype(params["wd_t"].dtype).itemsize
    # Sublane packing of the activation dtype: 8 (f32), 16 (bf16), 32 (int8/fp8).
    sublane = 8 * max(1, 4 // x_bytes)

    vmem_cap = _vmem_capacity_bytes()
    vmem_budget = (3 * vmem_cap) // 4

    def vmem_estimate(rt):
        io_tiles = 2 * 2 * rt * dim * x_bytes           # x + out tiles, double-buffered
        weights = 2 * 2 * dim * down_p * w_bytes        # Wd^T + Wu^T (conservative 2 bufs)
        biases = 2 * 2 * (down_p + dim) * 4
        f32_tmps = rt * down_p * 4 + 2 * rt * dim * 4   # z + 2nd-matmul acc + f32 residual
        return io_tiles + weights + biases + f32_tmps + (1 << 20)

    # --- choose the row tile --------------------------------------------------
    rt = _round_up(max(row_tile, sublane), sublane)
    ncores = _num_tensorcores()
    if ncores > 1:
        # Keep >= 1 grid step per TensorCore only on 2-TC chips (v7x/v4/v5p).
        rt = max(sublane, min(rt, _round_up(pl.cdiv(tokens, ncores), sublane)))
    while rt > sublane and vmem_estimate(rt) > vmem_budget:
        rt = max(sublane, _round_up(rt // 2, sublane))

    if tokens <= rt:
        block_rows, grid = tokens, (1,)                # single full-array block
    else:
        block_rows, grid = rt, (pl.cdiv(tokens, rt),)  # partial tail block masked by Pallas

    vmem_limit = min(max(int(1.25 * vmem_estimate(block_rows)) + (8 << 20), 32 << 20),
                     (7 * vmem_cap) // 8)

    cost = pl.CostEstimate(
        flops=4 * tokens * dim * down,                  # two matmuls
        transcendentals=0,
        bytes_accessed=(2 * tokens * dim * x_bytes      # read x + write out
                        + 2 * dim * down_p * w_bytes    # both weights
                        + (dim + down_p) * 4),          # biases
    )

    x2 = x.reshape(tokens, dim)                          # free (contiguous)

    def build(weight_pipeline_mode):
        kw = ({} if weight_pipeline_mode is None
              else {"pipeline_mode": weight_pipeline_mode})
        return pl.pallas_call(
            _adapter_kernel,
            out_shape=jax.ShapeDtypeStruct((tokens, dim), x.dtype),
            grid_spec=pltpu.PrefetchScalarGridSpec(
                num_scalar_prefetch=0,
                grid=grid,
                in_specs=[
                    pl.BlockSpec((block_rows, dim), lambda i: (i, 0)),     # x rows
                    pl.BlockSpec((dim, down_p), lambda i: (0, 0), **kw),   # Wd^T
                    pl.BlockSpec((1, down_p), lambda i: (0, 0), **kw),     # bd
                    pl.BlockSpec((down_p, dim), lambda i: (0, 0), **kw),   # Wu^T
                    pl.BlockSpec((1, dim), lambda i: (0, 0), **kw),        # bu
                ],
                out_specs=pl.BlockSpec((block_rows, dim), lambda i: (i, 0)),
            ),
            compiler_params=pltpu.CompilerParams(
                dimension_semantics=("parallel",),
                vmem_limit_bytes=vmem_limit,
            ),
            cost_estimate=cost,
        )

    args = (x2, params["wd_t"], params["bd"], params["wu_t"], params["bu"])
    try:
        # Grid-invariant weights/biases only need one VMEM buffer.
        out2 = jax.block_until_ready(build(pl.Buffered(1))(*args))
    except Exception:
        # TODO(synk): pipeline_mode=Buffered(1) rejected by this jax/libtpu;
        # fall back to default double-buffered weight specs.
        out2 = build(None)(*args)

    return out2.reshape(batch, seq, dim)


if __name__ == "__main__":
    # Small shapes consistent with the module: batch=2, seq=8, hidden dim=32.
    batch, seq, dim = 2, 8, 32
    down = dim // 8  # reduction_factor = 8

    key = jax.random.PRNGKey(0)
    kx, kwd, kwu = jax.random.split(key, 3)

    x = jax.random.normal(kx, (batch, seq, dim), dtype=jnp.float32)

    # Deterministic params mirroring nn.init.normal_(std=0.01), zero biases.
    w_down = 0.01 * jax.random.normal(kwd, (down, dim), dtype=jnp.float32)
    b_down = jnp.zeros((down,), dtype=jnp.float32)
    w_up = 0.01 * jax.random.normal(kwu, (dim, down), dtype=jnp.float32)
    b_up = jnp.zeros((dim,), dtype=jnp.float32)

    params = prepare_adapter_params(w_down, b_down, w_up, b_up)   # one-time prep
    out = adapter_forward(x, params)
    out = jax.block_until_ready(out)

    # Pure-JAX reference (same math as the PyTorch forward).
    z_ref = jnp.maximum(x @ w_down.T + b_down, 0.0)
    ref = x + (z_ref @ w_up.T + b_up)
    assert out.shape == ref.shape
    assert jnp.allclose(out, ref, atol=1e-5, rtol=1e-5)

    print("KERNEL_OK")
</pallas_src>

<mosaic_0001>
module attributes {stable_mosaic.version = 11 : i64} {
  func.func @_adapter_kernel(%arg0: i32, %arg1: memref<16x32xf32, #tpu.memory_space<vmem>>, %arg2: memref<32x128xf32, #tpu.memory_space<vmem>>, %arg3: memref<1x128xf32, #tpu.memory_space<vmem>>, %arg4: memref<128x32xf32, #tpu.memory_space<vmem>>, %arg5: memref<1x32xf32, #tpu.memory_space<vmem>>, %arg6: memref<16x32xf32, #tpu.memory_space<vmem>>) attributes {dimension_semantics = [#tpu.dimension_semantics<parallel>], iteration_bounds = array<i64: 1>, scalar_prefetch = 0 : i64, scratch_operands = 0 : i64, tpu.core_type = #tpu.core_type<tc>, window_params = [{transform_indices = @transform_0, window_bounds = array<i64: 16, 32>}, {pipeline_mode = #tpu.pipeline_mode<synchronous>, transform_indices = @transform_1, window_bounds = array<i64: 32, 128>}, {pipeline_mode = #tpu.pipeline_mode<synchronous>, transform_indices = @transform_2, window_bounds = array<i64: 1, 128>}, {pipeline_mode = #tpu.pipeline_mode<synchronous>, transform_indices = @transform_3, window_bounds = array<i64: 128, 32>}, {pipeline_mode = #tpu.pipeline_mode<synchronous>, transform_indices = @transform_4, window_bounds = array<i64: 1, 32>}, {transform_indices = @transform_5, window_bounds = array<i64: 16, 32>}]} {
    %c0 = arith.constant 0 : index
    %c0_0 = arith.constant 0 : index
    %0 = vector.load %arg1[%c0, %c0_0] : memref<16x32xf32, #tpu.memory_space<vmem>>, vector<16x32xf32>
    %c0_1 = arith.constant 0 : index
    %c0_2 = arith.constant 0 : index
    %1 = vector.load %arg2[%c0_1, %c0_2] : memref<32x128xf32, #tpu.memory_space<vmem>>, vector<32x128xf32>
    %cst = arith.constant dense<0.000000e+00> : vector<16x128xf32>
    %2 = tpu.matmul %0, %1, %cst {dimension_numbers = #tpu.dot_dimension_numbers<[1], [0], [0], [1], [0, 0, 1, 1], [], []>} : vector<16x32xf32>, vector<32x128xf32>, vector<16x128xf32> -> vector<16x128xf32>
    %c0_3 = arith.constant 0 : index
    %c0_4 = arith.constant 0 : index
    %3 = vector.load %arg3[%c0_3, %c0_4] : memref<1x128xf32, #tpu.memory_space<vmem>>, vector<1x128xf32>
    %4 = vector.broadcast %3 : vector<1x128xf32> to vector<16x128xf32>
    %5 = arith.addf %2, %4 : vector<16x128xf32>
    %cst_5 = arith.constant 0.000000e+00 : f32
    %6 = vector.broadcast %cst_5 : f32 to vector<16x128xf32>
    %7 = arith.maximumf %5, %6 : vector<16x128xf32>
    %c0_6 = arith.constant 0 : index
    %c0_7 = arith.constant 0 : index
    %8 = vector.load %arg4[%c0_6, %c0_7] : memref<128x32xf32, #tpu.memory_space<vmem>>, vector<128x32xf32>
    %cst_8 = arith.constant dense<0.000000e+00> : vector<16x32xf32>
    %9 = tpu.matmul %7, %8, %cst_8 {dimension_numbers = #tpu.dot_dimension_numbers<[1], [0], [0], [1], [0, 0, 1, 1], [], []>} : vector<16x128xf32>, vector<128x32xf32>, vector<16x32xf32> -> vector<16x32xf32>
    %c0_9 = arith.constant 0 : index
    %c0_10 = arith.constant 0 : index
    %10 = vector.load %arg5[%c0_9, %c0_10] : memref<1x32xf32, #tpu.memory_space<vmem>>, vector<1x32xf32>
    %11 = vector.broadcast %10 : vector<1x32xf32> to vector<16x32xf32>
    %12 = arith.addf %9, %11 : vector<16x32xf32>
    %13 = arith.addf %0, %12 : vector<16x32xf32>
    %c0_11 = arith.constant 0 : index
    %c0_12 = arith.constant 0 : index
    %14 = vector.load %arg6[%c0_11, %c0_12] : memref<16x32xf32, #tpu.memory_space<vmem>>, vector<16x32xf32>
    tpu.vector_store %arg6[%c0_11, %c0_12], %13 {strides = array<i32>} : memref<16x32xf32, #tpu.memory_space<vmem>>, vector<16x32xf32>,
    return
  }
  func.func @transform_0(%arg0: i32) -> (i32, i32) {
    %c0_i32 = arith.constant 0 : i32
    %c0_i32_0 = arith.constant 0 : i32
    return %arg0, %c0_i32 : i32, i32
  }
  func.func @transform_1(%arg0: i32) -> (i32, i32) {
    %c0_i32 = arith.constant 0 : i32
    %c0_i32_0 = arith.constant 0 : i32
    %c0_i32_1 = arith.constant 0 : i32
    return %c0_i32, %c0_i32_0 : i32, i32
  }
  func.func @transform_2(%arg0: i32) -> (i32, i32) {
    %c0_i32 = arith.constant 0 : i32
    %c0_i32_0 = arith.constant 0 : i32
    %c0_i32_1 = arith.constant 0 : i32
    return %c0_i32, %c0_i32_0 : i32, i32
  }
  func.func @transform_3(%arg0: i32) -> (i32, i32) {
    %c0_i32 = arith.constant 0 : i32
    %c0_i32_0 = arith.constant 0 : i32
    %c0_i32_1 = arith.constant 0 : i32
    return %c0_i32, %c0_i32_0 : i32, i32
  }
  func.func @transform_4(%arg0: i32) -> (i32, i32) {
    %c0_i32 = arith.constant 0 : i32
    %c0_i32_0 = arith.constant 0 : i32
    %c0_i32_1 = arith.constant 0 : i32
    return %c0_i32, %c0_i32_0 : i32, i32
  }
  func.func @transform_5(%arg0: i32) -> (i32, i32) {
    %c0_i32 = arith.constant 0 : i32
    %c0_i32_0 = arith.constant 0 : i32
    return %arg0, %c0_i32 : i32, i32
  }
}

module attributes {stable_mosaic.version = 11 : i64} {
  func.func @_adapter_kernel(%arg0: i32, %arg1: memref<16x32xf32, #tpu.memory_space<vmem>>, %arg2: memref<32x128xf32, #tpu.memory_space<vmem>>, %arg3: memref<1x128xf32, #tpu.memory_space<vmem>>, %arg4: memref<128x32xf32, #tpu.memory_space<vmem>>, %arg5: memref<1x32xf32, #tpu.memory_space<vmem>>, %arg6: memref<16x32xf32, #tpu.memory_space<vmem>>) attributes {dimension_semantics = [#tpu.dimension_semantics<parallel>], iteration_bounds = array<i64: 1>, scalar_prefetch = 0 : i64, scratch_operands = 0 : i64, tpu.core_type = #tpu.core_type<tc>, window_params = [{transform_indices = @transform_0, window_bounds = array<i64: 16, 32>}, {pipeline_mode = #tpu.pipeline_mode<synchronous>, transform_indices = @transform_1, window_bounds = array<i64: 32, 128>}, {pipeline_mode = #tpu.pipeline_mode<synchronous>, transform_indices = @transform_2, window_bounds = array<i64: 1, 128>}, {pipeline_mode = #tpu.pipeline_mode<synchronous>, transform_indices = @transform_3, window_bounds = array<i64: 128, 32>}, {pipeline_mode = #tpu.pipeline_mode<synchronous>, transform_indices = @transform_4, window_bounds = array<i64: 1, 32>}, {transform_indices = @transform_5, window_bounds = array<i64: 16, 32>}]} {
    %c0 = arith.constant 0 : index
    %c0_0 = arith.constant 0 : index
    %0 = vector.load %arg1[%c0, %c0_0] : memref<16x32xf32, #tpu.memory_space<vmem>>, vector<16x32xf32>
    %c0_1 = arith.constant 0 : index
    %c0_2 = arith.constant 0 : index
    %1 = vector.load %arg2[%c0_1, %c0_2] : memref<32x128xf32, #tpu.memory_space<vmem>>, vector<32x128xf32>
    %cst = arith.constant dense<0.000000e+00> : vector<16x128xf32>
    %2 = tpu.matmul %0, %1, %cst {dimension_numbers = #tpu.dot_dimension_numbers<[1], [0], [0], [1], [0, 0, 1, 1], [], []>} : vector<16x32xf32>, vector<32x128xf32>, vector<16x128xf32> -> vector<16x128xf32>
    %c0_3 = arith.constant 0 : index
    %c0_4 = arith.constant 0 : index
    %3 = vector.load %arg3[%c0_3, %c0_4] : memref<1x128xf32, #tpu.memory_space<vmem>>, vector<1x128xf32>
    %4 = vector.broadcast %3 : vector<1x128xf32> to vector<16x128xf32>
    %5 = arith.addf %2, %4 : vector<16x128xf32>
    %cst_5 = arith.constant 0.000000e+00 : f32
    %6 = vector.broadcast %cst_5 : f32 to vector<16x128xf32>
    %7 = arith.maximumf %5, %6 : vector<16x128xf32>
    %c0_6 = arith.constant 0 : index
    %c0_7 = arith.constant 0 : index
    %8 = vector.load %arg4[%c0_6, %c0_7] : memref<128x32xf32, #tpu.memory_space<vmem>>, vector<128x32xf32>
    %cst_8 = arith.constant dense<0.000000e+00> : vector<16x32xf32>
    %9 = tpu.matmul %7, %8, %cst_8 {dimension_numbers = #tpu.dot_dimension_numbers<[1], [0], [0], [1], [0, 0, 1, 1], [], []>} : vector<16x128xf32>, vector<128x32xf32>, vector<16x32xf32> -> vector<16x32xf32>
    %c0_9 = arith.constant 0 : index
    %c0_10 = arith.constant 0 : index
    %10 = vector.load %arg5[%c0_9, %c0_10] : memref<1x32xf32, #tpu.memory_space<vmem>>, vector<1x32xf32>
    %11 = vector.broadcast %10 : vector<1x32xf32> to vector<16x32xf32>
    %12 = arith.addf %9, %11 : vector<16x32xf32>
    %13 = arith.addf %0, %12 : vector<16x32xf32>
    %c0_11 = arith.constant 0 : index
    %c0_12 = arith.constant 0 : index
    %14 = vector.load %arg6[%c0_11, %c0_12] : memref<16x32xf32, #tpu.memory_space<vmem>>, vector<16x32xf32>
    tpu.vector_store %arg6[%c0_11, %c0_12], %13 {strides = array<i32>} : memref<16x32xf32, #tpu.memory_space<vmem>>, vector<16x32xf32>,
    return
  }
  func.func @transform_0(%arg0: i32) -> (i32, i32) {
    %c0_i32 = arith.constant 0 : i32
    %c0_i32_0 = arith.constant 0 : i32
    return %arg0, %c0_i32 : i32, i32
  }
  func.func @transform_1(%arg0: i32) -> (i32, i32) {
    %c0_i32 = arith.constant 0 : i32
    %c0_i32_0 = arith.constant 0 : i32
    %c0_i32_1 = arith.constant 0 : i32
    return %c0_i32, %c0_i32_0 : i32, i32
  }
  func.func @transform_2(%arg0: i32) -> (i32, i32) {
    %c0_i32 = arith.constant 0 : i32
    %c0_i32_0 = arith.constant 0 : i32
    %c0_i32_1 = arith.constant 0 : i32
    return %c0_i32, %c0_i32_0 : i32, i32
  }
  func.func @transform_3(%arg0: i32) -> (i32, i32) {
    %c0_i32 = arith.constant 0 : i32
    %c0_i32_0 = arith.constant 0 : i32
    %c0_i32_1 = arith.constant 0 : i32
    return %c0_i32, %c0_i32_0 : i32, i32
  }
  func.func @transform_4(%arg0: i32) -> (i32, i32) {
    %c0_i32 = arith.constant 0 : i32
    %c0_i32_0 = arith.constant 0 : i32
    %c0_i32_1 = arith.constant 0 : i32
    return %c0_i32, %c0_i32_0 : i32, i32
  }
  func.func @transform_5(%arg0: i32) -> (i32, i32) {
    %c0_i32 = arith.constant 0 : i32
    %c0_i32_0 = arith.constant 0 : i32
    return %arg0, %c0_i32 : i32, i32
  }
}

</mosaic_0001>

<llo_original>
// kernel: tpu_custom_call.1
$region0: #{tpu_custom_call.1}
  #allocation0 [shape = 'u32[]', space=smem, size = 0x4, offset = 0x4, fixed_abs, tag = 'smem constant byte address 0x4 - core index']
  #allocation1 [shape = 'u32[144,128]{1,0:T(1,128)}', space=vmem, size = 0x12000, scoped, tag = 'internal scratch']
  %s0 = inlined_call_operand.vmem [shape: f32[16,32], index: 0, kind: input, shape index: {}]
  %s1 = inlined_call_operand.vmem [shape: f32[32,128], index: 1, kind: input, shape index: {}]
  %s2 = inlined_call_operand.vmem [shape: f32[1,128], index: 2, kind: input, shape index: {}]
  %s3 = inlined_call_operand.vmem [shape: f32[128,32], index: 3, kind: input, shape index: {}]
  %s4 = inlined_call_operand.vmem [shape: f32[1,32], index: 4, kind: input, shape index: {}]
  %s5 = inlined_call_operand.hbm [shape: f32[16,32], index: 5, kind: output, shape index: {}]
  %s6 = sld [smem:[#allocation0]]
  $region30: #{tpu_custom_call.1} parent=0
    _
  %s8 = ssub.s32 1, %s6
  %s9 = scalar_select 0, %s8, %s6
  $region1: #{tpu_custom_call.1} parent=0
    #allocation2 [shape = 'u8[8192]{0}', space=vmem, size = 0x2000, scoped, tag = 'output window, operand 0, single buffered']
    #allocation3 [shape = 's32[1]{0}', space=sflag, size = 0x4, scoped, tag = 'scoped memory for tpu_custom_call.1']
    %10 = vsyncpa [#allocation3], 0
    // Predicated region
    $region2: #{tpu_custom_call.1} parent=1 // pred_check
      _
    $region3: #{tpu_custom_call.1} parent=1 // pred_check_branch
      %12 = sbr.rel (0) target = $region5
    $region4: #{tpu_custom_call.1} parent=1 // pred_region
      _
    $region5: #{tpu_custom_call.1} parent=1 // pred_fallthru
      _
    // Predicated region
    $region6: #{tpu_custom_call.1} parent=1 // pred_check
      _
    $region7: #{tpu_custom_call.1} parent=1 // pred_check_branch
      %14 = sbr.rel (0) target = $region9
    $region8: #{tpu_custom_call.1} parent=1 // pred_region
      _
    $region9: #{tpu_custom_call.1} parent=1 // pred_fallthru
      _
    // Predicated region
    $region10: #{tpu_custom_call.1} parent=1 // pred_check
      _
    $region11: #{tpu_custom_call.1} parent=1 // pred_check_branch
      %16 = sbr.rel (0) target = $region13
    $region12: #{tpu_custom_call.1} parent=1 // pred_region
      _
    $region13: #{tpu_custom_call.1} parent=1 // pred_fallthru
      _
    // Predicated region
    $region14: #{tpu_custom_call.1} parent=1 // pred_check
      _
    $region15: #{tpu_custom_call.1} parent=1 // pred_check_branch
      %18 = sbr.rel (0) target = $region17
    $region16: #{tpu_custom_call.1} parent=1 // pred_region
      _
    $region17: #{tpu_custom_call.1} parent=1 // pred_fallthru
      _
    // Predicated region
    $region18: #{tpu_custom_call.1} parent=1 // pred_check
      _
    $region19: #{tpu_custom_call.1} parent=1 // pred_check_branch
      %20 = sbr.rel (0) target = $region21
    $region20: #{tpu_custom_call.1} parent=1 // pred_region
      _
    $region21: #{tpu_custom_call.1} parent=1 // pred_fallthru
      _
    %v21 = vld [vmem:[%s0] sm:$0xff]
    %v22 = vld [vmem:[%s0 + $0x8] sm:$0xff]
    %v23 = vld [vmem:[%s1] sm:$0xff]
    %v24 = vld [vmem:[%s1 + $0x8] sm:$0xff]
    %v25 = vld [vmem:[%s1 + $0x10] sm:$0xff]
    %v26 = vld [vmem:[%s1 + $0x18] sm:$0xff]
    %v27 = vld [vmem:[%s2] sm:$0x1]
    %v29 = vlaneseq
    %v30 = vshrl.u32 %v29, 7
    %v31 = vsub.s32 0, %v30
    %v32 = vrot.slane %v27, %v31
    %vm34 = vcmask 261120
    %v36 = vsel %vm34, %v21, 0
    %v39 = vsel %vm34, %v22, 0
    %41 = vmatprep.subr.mxu0 0.0
    %42 = vmatpush1.msra.mxu0 %v23
    %43 = vmatprep.subr.mxu0 0.0
    %44 = vmatpush1.msra.mxu0 %v24
    %45 = vmatprep.subr.mxu0 0.0
    %46 = vmatpush1.msra.mxu0 %v25
    %47 = vmatprep.subr.mxu0 0.0
    %48 = vmatpush1.msra.mxu0 %v26
    %49 = vmatprep.subr.mxu0 0.0
    %50 = vmatpush1.msra.mxu0 0.0
    %51 = vmatprep.subr.mxu0 0.0
    %52 = vmatpush1.msra.mxu0 0.0
    %53 = vmatprep.subr.mxu0 0.0
    %54 = vmatpush1.msra.mxu0 0.0
    %55 = vmatprep.subr.mxu0 0.0
    %56 = vmatpush1.msra.mxu0 0.0
    %57 = vmatprep.subr.mxu0 0.0
    %58 = vmatpush1.msra.mxu0 0.0
    %59 = vmatprep.subr.mxu0 0.0
    %60 = vmatpush1.msra.mxu0 0.0
    %61 = vmatprep.subr.mxu0 0.0
    %62 = vmatpush1.msra.mxu0 0.0
    %63 = vmatprep.subr.mxu0 0.0
    %64 = vmatpush1.msra.mxu0 0.0
    %65 = vmatprep.subr.mxu0 0.0
    %66 = vmatpush1.msra.mxu0 0.0
    %67 = vmatprep.subr.mxu0 0.0
    %68 = vmatpush1.msra.mxu0 0.0
    %69 = vmatprep.subr.mxu0 0.0
    %70 = vmatpush1.msra.mxu0 0.0
    %71 = vmatprep.subr.mxu0 0.0
    %72 = vmatpush1.msra.mxu0 0.0
    %73 = vmatprep.subr.mxu0 0.0
    %74 = vmatpush1.msra.mxu0 0.0
    %75 = vmatprep.subr.mxu0 0.0
    %76 = vmatpush1.msra.mxu0 0.0
    %77 = vmatprep.subr.mxu0 0.0
    %78 = vmatpush1.msra.mxu0 0.0
    %79 = vmatprep.subr.mxu0 0.0
    %80 = vmatpush1.msra.mxu0 0.0
    %81 = vmatprep.subr.mxu0 0.0
    %82 = vmatpush1.msra.mxu0 0.0
    %83 = vmatprep.subr.mxu0 0.0
    %84 = vmatpush1.msra.mxu0 0.0
    %85 = vmatprep.subr.mxu0 0.0
    %86 = vmatpush1.msra.mxu0 0.0
    %87 = vmatprep.subr.mxu0 0.0
    %88 = vmatpush1.msra.mxu0 0.0
    %89 = vmatprep.subr.mxu0 0.0
    %90 = vmatpush1.msra.mxu0 0.0
    %91 = vmatprep.subr.mxu0 0.0
    %92 = vmatpush1.msra.mxu0 0.0
    %93 = vmatprep.subr.mxu0 0.0
    %94 = vmatpush1.msra.mxu0 0.0
    %95 = vmatprep.subr.mxu0 0.0
    %96 = vmatpush1.msra.mxu0 0.0
    %97 = vmatprep.subr.mxu0 0.0
    %98 = vmatpush1.msra.mxu0 0.0
    %99 = vmatprep.subr.mxu0 0.0
    %100 = vmatpush1.msra.mxu0 0.0
    %101 = vmatprep.subr.mxu0 0.0
    %102 = vmatpush1.msra.mxu0 0.0
    %103 = vmatprep.subr.mxu0 0.0
    %104 = vmatpush1.msra.mxu0 0.0
    %105 = vmatprep.mubr.f32.mxu0 0.0
    %106 = vmatmul.mubr.f32.gmra.mrb[0].mxu0 %v36
    %v107 = vpop.f32.mrb[0].mxu0
    %v108 = vadd.f32 %v32, %v107
    %v109 = vpop.f32.mrb[0].mxu0
    %110 = vmatprep.mubr.f32.mxu0 0.0
    %111 = vmatmul.mubr.f32.gmra.mrb[0].mxu0 %v39
    %v112 = vpop.f32.mrb[0].mxu0
    %v113 = vadd.f32 %v32, %v112
    %v114 = vpop.f32.mrb[0].mxu0
    %115 = vdwg.mxu0
    %v116 = vmax.f32 %v108, 0.0
    %v117 = vmax.f32 %v113, 0.0
    %v118 = vld [vmem:[%s3] sm:$0xff]
    %v119 = vld [vmem:[%s3 + $0x8] sm:$0xff]
    %v120 = vld [vmem:[%s3 + $0x10] sm:$0xff]
    %v121 = vld [vmem:[%s3 + $0x18] sm:$0xff]
    %v122 = vld [vmem:[%s3 + $0x20] sm:$0xff]
    %v123 = vld [vmem:[%s3 + $0x28] sm:$0xff]
    %v124 = vld [vmem:[%s3 + $0x30] sm:$0xff]
    %v125 = vld [vmem:[%s3 + $0x38] sm:$0xff]
    %v126 = vld [vmem:[%s3 + $0x40] sm:$0xff]
    %v127 = vld [vmem:[%s3 + $0x48] sm:$0xff]
    %v128 = vld [vmem:[%s3 + $0x50] sm:$0xff]
    %v129 = vld [vmem:[%s3 + $0x58] sm:$0xff]
    %v130 = vld [vmem:[%s3 + $0x60] sm:$0xff]
    %v131 = vld [vmem:[%s3 + $0x68] sm:$0xff]
    %v132 = vld [vmem:[%s3 + $0x70] sm:$0xff]
    %v133 = vld [vmem:[%s3 + $0x78] sm:$0xff]
    %v134 = vld [vmem:[%s4] sm:$0x1]
    %v136 = vlaneseq
    %v137 = vshrl.u32 %v136, 7
    %v138 = vsub.s32 0, %v137
    %v139 = vrot.slane %v134, %v138
    %141 = vmatprep.subr.mxu0 0.0
    %142 = vmatpush1.msra.mxu0 %v118
    %143 = vmatprep.subr.mxu0 0.0
    %144 = vmatpush1.msra.mxu0 %v119
    %145 = vmatprep.subr.mxu0 0.0
    %146 = vmatpush1.msra.mxu0 %v120
    %147 = vmatprep.subr.mxu0 0.0
    %148 = vmatpush1.msra.mxu0 %v121
    %149 = vmatprep.subr.mxu0 0.0
    %150 = vmatpush1.msra.mxu0 %v122
    %151 = vmatprep.subr.mxu0 0.0
    %152 = vmatpush1.msra.mxu0 %v123
    %153 = vmatprep.subr.mxu0 0.0
    %154 = vmatpush1.msra.mxu0 %v124
    %155 = vmatprep.subr.mxu0 0.0
    %156 = vmatpush1.msra.mxu0 %v125
    %157 = vmatprep.subr.mxu0 0.0
    %158 = vmatpush1.msra.mxu0 %v126
    %159 = vmatprep.subr.mxu0 0.0
    %160 = vmatpush1.msra.mxu0 %v127
    %161 = vmatprep.subr.mxu0 0.0
    %162 = vmatpush1.msra.mxu0 %v128
    %163 = vmatprep.subr.mxu0 0.0
    %164 = vmatpush1.msra.mxu0 %v129
    %165 = vmatprep.subr.mxu0 0.0
    %166 = vmatpush1.msra.mxu0 %v130
    %167 = vmatprep.subr.mxu0 0.0
    %168 = vmatpush1.msra.mxu0 %v131
    %169 = vmatprep.subr.mxu0 0.0
    %170 = vmatpush1.msra.mxu0 %v132
    %171 = vmatprep.subr.mxu0 0.0
    %172 = vmatpush1.msra.mxu0 %v133
    %173 = vmatprep.subr.mxu0 0.0
    %174 = vmatpush1.msra.mxu0 0.0
    %175 = vmatprep.subr.mxu0 0.0
    %176 = vmatpush1.msra.mxu0 0.0
    %177 = vmatprep.subr.mxu0 0.0
    %178 = vmatpush1.msra.mxu0 0.0
    %179 = vmatprep.subr.mxu0 0.0
    %180 = vmatpush1.msra.mxu0 0.0
    %181 = vmatprep.subr.mxu0 0.0
    %182 = vmatpush1.msra.mxu0 0.0
    %183 = vmatprep.subr.mxu0 0.0
    %184 = vmatpush1.msra.mxu0 0.0
    %185 = vmatprep.subr.mxu0 0.0
    %186 = vmatpush1.msra.mxu0 0.0
    %187 = vmatprep.subr.mxu0 0.0
    %188 = vmatpush1.msra.mxu0 0.0
    %189 = vmatprep.subr.mxu0 0.0
    %190 = vmatpush1.msra.mxu0 0.0
    %191 = vmatprep.subr.mxu0 0.0
    %192 = vmatpush1.msra.mxu0 0.0
    %193 = vmatprep.subr.mxu0 0.0
    %194 = vmatpush1.msra.mxu0 0.0
    %195 = vmatprep.subr.mxu0 0.0
    %196 = vmatpush1.msra.mxu0 0.0
    %197 = vmatprep.subr.mxu0 0.0
    %198 = vmatpush1.msra.mxu0 0.0
    %199 = vmatprep.subr.mxu0 0.0
    %200 = vmatpush1.msra.mxu0 0.0
    %201 = vmatprep.subr.mxu0 0.0
    %202 = vmatpush1.msra.mxu0 0.0
    %203 = vmatprep.subr.mxu0 0.0
    %204 = vmatpush1.msra.mxu0 0.0
    %205 = vmatprep.mubr.f32.mxu0 0.0
    %206 = vmatmul.mubr.f32.gmra.mrb[0].mxu0 %v116
    %v207 = vpop.f32.mrb[0].mxu0
    %v208 = vadd.f32 %v139, %v207
    %v209 = vpop.f32.mrb[0].mxu0
    %210 = vmatprep.mubr.f32.mxu0 0.0
    %211 = vmatmul.mubr.f32.gmra.mrb[0].mxu0 %v117
    %v212 = vpop.f32.mrb[0].mxu0
    %v213 = vadd.f32 %v139, %v212
    %v214 = vpop.f32.mrb[0].mxu0
    %215 = vdwg.mxu0
    %v216 = vadd.f32 %v21, %v208
    %v217 = vadd.f32 %v22, %v213
    %218 = vst.msk [vmem:[#allocation2] sm:$0xff] %vm34, %v216
    %219 = vst.msk [vmem:[#allocation2 + $0x8] sm:$0xff] %vm34, %v217
    // Predicated region
    $region22: #{tpu_custom_call.1} parent=1 // pred_check
      _
    $region23: #{tpu_custom_call.1} parent=1 // pred_check_branch
      %221 = sbr.rel (0) target = $region25
    $region24: #{tpu_custom_call.1} parent=1 // pred_region
      %s223 = ssub.s32 256, 256
      %224 = vsyncadd [#allocation3], %s223
      %s225 = sshll.u32 [#allocation2], 4
      %s226 = int_to_ptr.vmem [resolvable:$true] %s225
      %231 = dma.vmem_to_hbm [thread:$0]  %s226, 256, %s5, [#allocation3], 128, 128, 8
    $region25: #{tpu_custom_call.1} parent=1 // pred_fallthru
      _
    // Predicated region
    $region26: #{tpu_custom_call.1} parent=1 // pred_check
      _
    $region27: #{tpu_custom_call.1} parent=1 // pred_check_branch
      %233 = sbr.rel (0) target = $region29
    $region28: #{tpu_custom_call.1} parent=1 // pred_region
      %234 = dma.done [#allocation3], 256
    $region29: #{tpu_custom_call.1} parent=1 // pred_fallthru
      _
    %235 = vsyncpa [#allocation3], 1

// kernel: tpu_custom_call.1
$region0: #{tpu_custom_call.1}
  #allocation0 [shape = 'u32[]', space=smem, size = 0x4, offset = 0x4, fixed_abs, tag = 'smem constant byte address 0x4 - core index']
  #allocation1 [shape = 'u32[144,128]{1,0:T(1,128)}', space=vmem, size = 0x12000, scoped, tag = 'internal scratch']
  %s0 = inlined_call_operand.vmem [shape: f32[16,32], index: 0, kind: input, shape index: {}]
  %s1 = inlined_call_operand.vmem [shape: f32[32,128], index: 1, kind: input, shape index: {}]
  %s2 = inlined_call_operand.vmem [shape: f32[1,128], index: 2, kind: input, shape index: {}]
  %s3 = inlined_call_operand.vmem [shape: f32[128,32], index: 3, kind: input, shape index: {}]
  %s4 = inlined_call_operand.vmem [shape: f32[1,32], index: 4, kind: input, shape index: {}]
  %s5 = inlined_call_operand.hbm [shape: f32[16,32], index: 5, kind: output, shape index: {}]
  %s6 = sld [smem:[#allocation0]]
  $region30: #{tpu_custom_call.1} parent=0
    _
  %s8 = ssub.s32 1, %s6
  %s9 = scalar_select 0, %s8, %s6
  $region1: #{tpu_custom_call.1} parent=0
    #allocation2 [shape = 'u8[8192]{0}', space=vmem, size = 0x2000, scoped, tag = 'output window, operand 0, single buffered']
    #allocation3 [shape = 's32[1]{0}', space=sflag, size = 0x4, scoped, tag = 'scoped memory for tpu_custom_call.1']
    %10 = vsyncpa [#allocation3], 0
    // Predicated region
    $region2: #{tpu_custom_call.1} parent=1 // pred_check
      _
    $region3: #{tpu_custom_call.1} parent=1 // pred_check_branch
      %12 = sbr.rel (0) target = $region5
    $region4: #{tpu_custom_call.1} parent=1 // pred_region
      _
    $region5: #{tpu_custom_call.1} parent=1 // pred_fallthru
      _
    // Predicated region
    $region6: #{tpu_custom_call.1} parent=1 // pred_check
      _
    $region7: #{tpu_custom_call.1} parent=1 // pred_check_branch
      %14 = sbr.rel (0) target = $region9
    $region8: #{tpu_custom_call.1} parent=1 // pred_region
      _
    $region9: #{tpu_custom_call.1} parent=1 // pred_fallthru
      _
    // Predicated region
    $region10: #{tpu_custom_call.1} parent=1 // pred_check
      _
    $region11: #{tpu_custom_call.1} parent=1 // pred_check_branch
      %16 = sbr.rel (0) target = $region13
    $region12: #{tpu_custom_call.1} parent=1 // pred_region
      _
    $region13: #{tpu_custom_call.1} parent=1 // pred_fallthru
      _
    // Predicated region
    $region14: #{tpu_custom_call.1} parent=1 // pred_check
      _
    $region15: #{tpu_custom_call.1} parent=1 // pred_check_branch
      %18 = sbr.rel (0) target = $region17
    $region16: #{tpu_custom_call.1} parent=1 // pred_region
      _
    $region17: #{tpu_custom_call.1} parent=1 // pred_fallthru
      _
    // Predicated region
    $region18: #{tpu_custom_call.1} parent=1 // pred_check
      _
    $region19: #{tpu_custom_call.1} parent=1 // pred_check_branch
      %20 = sbr.rel (0) target = $region21
    $region20: #{tpu_custom_call.1} parent=1 // pred_region
      _
    $region21: #{tpu_custom_call.1} parent=1 // pred_fallthru
      _
    %v21 = vld [vmem:[%s0] sm:$0xff]
    %v22 = vld [vmem:[%s0 + $0x8] sm:$0xff]
    %v23 = vld [vmem:[%s1] sm:$0xff]
    %v24 = vld [vmem:[%s1 + $0x8] sm:$0xff]
    %v25 = vld [vmem:[%s1 + $0x10] sm:$0xff]
    %v26 = vld [vmem:[%s1 + $0x18] sm:$0xff]
    %v27 = vld [vmem:[%s2] sm:$0x1]
    %v29 = vlaneseq
    %v30 = vshrl.u32 %v29, 7
    %v31 = vsub.s32 0, %v30
    %v32 = vrot.slane %v27, %v31
    %vm34 = vcmask 261120
    %v36 = vsel %vm34, %v21, 0
    %v39 = vsel %vm34, %v22, 0
    %41 = vmatprep.subr.mxu0 0.0
    %42 = vmatpush1.msra.mxu0 %v23
    %43 = vmatprep.subr.mxu0 0.0
    %44 = vmatpush1.msra.mxu0 %v24
    %45 = vmatprep.subr.mxu0 0.0
    %46 = vmatpush1.msra.mxu0 %v25
    %47 = vmatprep.subr.mxu0 0.0
    %48 = vmatpush1.msra.mxu0 %v26
    %49 = vmatprep.subr.mxu0 0.0
    %50 = vmatpush1.msra.mxu0 0.0
    %51 = vmatprep.subr.mxu0 0.0
    %52 = vmatpush1.msra.mxu0 0.0
    %53 = vmatprep.subr.mxu0 0.0
    %54 = vmatpush1.msra.mxu0 0.0
    %55 = vmatprep.subr.mxu0 0.0
    %56 = vmatpush1.msra.mxu0 0.0
    %57 = vmatprep.subr.mxu0 0.0
    %58 = vmatpush1.msra.mxu0 0.0
    %59 = vmatprep.subr.mxu0 0.0
    %60 = vmatpush1.msra.mxu0 0.0
    %61 = vmatprep.subr.mxu0 0.0
    %62 = vmatpush1.msra.mxu0 0.0
    %63 = vmatprep.subr.mxu0 0.0
    %64 = vmatpush1.msra.mxu0 0.0
    %65 = vmatprep.subr.mxu0 0.0
    %66 = vmatpush1.msra.mxu0 0.0
    %67 = vmatprep.subr.mxu0 0.0
    %68 = vmatpush1.msra.mxu0 0.0
    %69 = vmatprep.subr.mxu0 0.0
    %70 = vmatpush1.msra.mxu0 0.0
    %71 = vmatprep.subr.mxu0 0.0
    %72 = vmatpush1.msra.mxu0 0.0
    %73 = vmatprep.subr.mxu0 0.0
    %74 = vmatpush1.msra.mxu0 0.0
    %75 = vmatprep.subr.mxu0 0.0
    %76 = vmatpush1.msra.mxu0 0.0
    %77 = vmatprep.subr.mxu0 0.0
    %78 = vmatpush1.msra.mxu0 0.0
    %79 = vmatprep.subr.mxu0 0.0
    %80 = vmatpush1.msra.mxu0 0.0
    %81 = vmatprep.subr.mxu0 0.0
    %82 = vmatpush1.msra.mxu0 0.0
    %83 = vmatprep.subr.mxu0 0.0
    %84 = vmatpush1.msra.mxu0 0.0
    %85 = vmatprep.subr.mxu0 0.0
    %86 = vmatpush1.msra.mxu0 0.0
    %87 = vmatprep.subr.mxu0 0.0
    %88 = vmatpush1.msra.mxu0 0.0
    %89 = vmatprep.subr.mxu0 0.0
    %90 = vmatpush1.msra.mxu0 0.0
    %91 = vmatprep.subr.mxu0 0.0
    %92 = vmatpush1.msra.mxu0 0.0
    %93 = vmatprep.subr.mxu0 0.0
    %94 = vmatpush1.msra.mxu0 0.0
    %95 = vmatprep.subr.mxu0 0.0
    %96 = vmatpush1.msra.mxu0 0.0
    %97 = vmatprep.subr.mxu0 0.0
    %98 = vmatpush1.msra.mxu0 0.0
    %99 = vmatprep.subr.mxu0 0.0
    %100 = vmatpush1.msra.mxu0 0.0
    %101 = vmatprep.subr.mxu0 0.0
    %102 = vmatpush1.msra.mxu0 0.0
    %103 = vmatprep.subr.mxu0 0.0
    %104 = vmatpush1.msra.mxu0 0.0
    %105 = vmatprep.mubr.f32.mxu0 0.0
    %106 = vmatmul.mubr.f32.gmra.mrb[0].mxu0 %v36
    %v107 = vpop.f32.mrb[0].mxu0
    %v108 = vadd.f32 %v32, %v107
    %v109 = vpop.f32.mrb[0].mxu0
    %110 = vmatprep.mubr.f32.mxu0 0.0
    %111 = vmatmul.mubr.f32.gmra.mrb[0].mxu0 %v39
    %v112 = vpop.f32.mrb[0].mxu0
    %v113 = vadd.f32 %v32, %v112
    %v114 = vpop.f32.mrb[0].mxu0
    %115 = vdwg.mxu0
    %v116 = vmax.f32 %v108, 0.0
    %v117 = vmax.f32 %v113, 0.0
    %v118 = vld [vmem:[%s3] sm:$0xff]
    %v119 = vld [vmem:[%s3 + $0x8] sm:$0xff]
    %v120 = vld [vmem:[%s3 + $0x10] sm:$0xff]
    %v121 = vld [vmem:[%s3 + $0x18] sm:$0xff]
    %v122 = vld [vmem:[%s3 + $0x20] sm:$0xff]
    %v123 = vld [vmem:[%s3 + $0x28] sm:$0xff]
    %v124 = vld [vmem:[%s3 + $0x30] sm:$0xff]
    %v125 = vld [vmem:[%s3 + $0x38] sm:$0xff]
    %v126 = vld [vmem:[%s3 + $0x40] sm:$0xff]
    %v127 = vld [vmem:[%s3 + $0x48] sm:$0xff]
    %v128 = vld [vmem:[%s3 + $0x50] sm:$0xff]
    %v129 = vld [vmem:[%s3 + $0x58] sm:$0xff]
    %v130 = vld [vmem:[%s3 + $0x60] sm:$0xff]
    %v131 = vld [vmem:[%s3 + $0x68] sm:$0xff]
    %v132 = vld [vmem:[%s3 + $0x70] sm:$0xff]
    %v133 = vld [vmem:[%s3 + $0x78] sm:$0xff]
    %v134 = vld [vmem:[%s4] sm:$0x1]
    %v136 = vlaneseq
    %v137 = vshrl.u32 %v136, 7
    %v138 = vsub.s32 0, %v137
    %v139 = vrot.slane %v134, %v138
    %141 = vmatprep.subr.mxu0 0.0
    %142 = vmatpush1.msra.mxu0 %v118
    %143 = vmatprep.subr.mxu0 0.0
    %144 = vmatpush1.msra.mxu0 %v119
    %145 = vmatprep.subr.mxu0 0.0
    %146 = vmatpush1.msra.mxu0 %v120
    %147 = vmatprep.subr.mxu0 0.0
    %148 = vmatpush1.msra.mxu0 %v121
    %149 = vmatprep.subr.mxu0 0.0
    %150 = vmatpush1.msra.mxu0 %v122
    %151 = vmatprep.subr.mxu0 0.0
    %152 = vmatpush1.msra.mxu0 %v123
    %153 = vmatprep.subr.mxu0 0.0
    %154 = vmatpush1.msra.mxu0 %v124
    %155 = vmatprep.subr.mxu0 0.0
    %156 = vmatpush1.msra.mxu0 %v125
    %157 = vmatprep.subr.mxu0 0.0
    %158 = vmatpush1.msra.mxu0 %v126
    %159 = vmatprep.subr.mxu0 0.0
    %160 = vmatpush1.msra.mxu0 %v127
    %161 = vmatprep.subr.mxu0 0.0
    %162 = vmatpush1.msra.mxu0 %v128
    %163 = vmatprep.subr.mxu0 0.0
    %164 = vmatpush1.msra.mxu0 %v129
    %165 = vmatprep.subr.mxu0 0.0
    %166 = vmatpush1.msra.mxu0 %v130
    %167 = vmatprep.subr.mxu0 0.0
    %168 = vmatpush1.msra.mxu0 %v131
    %169 = vmatprep.subr.mxu0 0.0
    %170 = vmatpush1.msra.mxu0 %v132
    %171 = vmatprep.subr.mxu0 0.0
    %172 = vmatpush1.msra.mxu0 %v133
    %173 = vmatprep.subr.mxu0 0.0
    %174 = vmatpush1.msra.mxu0 0.0
    %175 = vmatprep.subr.mxu0 0.0
    %176 = vmatpush1.msra.mxu0 0.0
    %177 = vmatprep.subr.mxu0 0.0
    %178 = vmatpush1.msra.mxu0 0.0
    %179 = vmatprep.subr.mxu0 0.0
    %180 = vmatpush1.msra.mxu0 0.0
    %181 = vmatprep.subr.mxu0 0.0
    %182 = vmatpush1.msra.mxu0 0.0
    %183 = vmatprep.subr.mxu0 0.0
    %184 = vmatpush1.msra.mxu0 0.0
    %185 = vmatprep.subr.mxu0 0.0
    %186 = vmatpush1.msra.mxu0 0.0
    %187 = vmatprep.subr.mxu0 0.0
    %188 = vmatpush1.msra.mxu0 0.0
    %189 = vmatprep.subr.mxu0 0.0
    %190 = vmatpush1.msra.mxu0 0.0
    %191 = vmatprep.subr.mxu0 0.0
    %192 = vmatpush1.msra.mxu0 0.0
    %193 = vmatprep.subr.mxu0 0.0
    %194 = vmatpush1.msra.mxu0 0.0
    %195 = vmatprep.subr.mxu0 0.0
    %196 = vmatpush1.msra.mxu0 0.0
    %197 = vmatprep.subr.mxu0 0.0
    %198 = vmatpush1.msra.mxu0 0.0
    %199 = vmatprep.subr.mxu0 0.0
    %200 = vmatpush1.msra.mxu0 0.0
    %201 = vmatprep.subr.mxu0 0.0
    %202 = vmatpush1.msra.mxu0 0.0
    %203 = vmatprep.subr.mxu0 0.0
    %204 = vmatpush1.msra.mxu0 0.0
    %205 = vmatprep.mubr.f32.mxu0 0.0
    %206 = vmatmul.mubr.f32.gmra.mrb[0].mxu0 %v116
    %v207 = vpop.f32.mrb[0].mxu0
    %v208 = vadd.f32 %v139, %v207
    %v209 = vpop.f32.mrb[0].mxu0
    %210 = vmatprep.mubr.f32.mxu0 0.0
    %211 = vmatmul.mubr.f32.gmra.mrb[0].mxu0 %v117
    %v212 = vpop.f32.mrb[0].mxu0
    %v213 = vadd.f32 %v139, %v212
    %v214 = vpop.f32.mrb[0].mxu0
    %215 = vdwg.mxu0
    %v216 = vadd.f32 %v21, %v208
    %v217 = vadd.f32 %v22, %v213
    %218 = vst.msk [vmem:[#allocation2] sm:$0xff] %vm34, %v216
    %219 = vst.msk [vmem:[#allocation2 + $0x8] sm:$0xff] %vm34, %v217
    // Predicated region
    $region22: #{tpu_custom_call.1} parent=1 // pred_check
      _
    $region23: #{tpu_custom_call.1} parent=1 // pred_check_branch
      %221 = sbr.rel (0) target = $region25
    $region24: #{tpu_custom_call.1} parent=1 // pred_region
      %s223 = ssub.s32 256, 256
      %224 = vsyncadd [#allocation3], %s223
      %s225 = sshll.u32 [#allocation2], 4
      %s226 = int_to_ptr.vmem [resolvable:$true] %s225
      %231 = dma.vmem_to_hbm [thread:$0]  %s226, 256, %s5, [#allocation3], 128, 128, 8
    $region25: #{tpu_custom_call.1} parent=1 // pred_fallthru
      _
    // Predicated region
    $region26: #{tpu_custom_call.1} parent=1 // pred_check
      _
    $region27: #{tpu_custom_call.1} parent=1 // pred_check_branch
      %233 = sbr.rel (0) target = $region29
    $region28: #{tpu_custom_call.1} parent=1 // pred_region
      %234 = dma.done [#allocation3], 256
    $region29: #{tpu_custom_call.1} parent=1 // pred_fallthru
      _
    %235 = vsyncpa [#allocation3], 1

</llo_original>
